<compile_context>
chip_gen: v7x
topology: tpu7x:2x2x1
jax: 0.10.0
libtpu: 0.0.40
codegen_flags: <defaults>
</compile_context>

<pallas_src>
import jax
import jax.numpy as jnp
import numpy as np
from jax.experimental import pallas as pl
from jax.experimental.pallas import tpu as pltpu


def _round_up(x, m):
    return -(-x // m) * m


# ---------------------------------------------------------------------------
# Hot-path kernel:  out = h @ W1 + gproj[batch]     (bias already folded into gproj)
# ---------------------------------------------------------------------------
def fused_kernel(batch_ref, h_ref, gproj_ref, w1_ref, o_ref):
    # batch_ref: [tm, 1] int32   per-atom graph index (edge rows may be garbage)
    # h_ref:     [tm, H]         streamed atom features (native dtype, cast here)
    # gproj_ref: [Bp, H] bf16    resident per-graph projected retrieval features
    # w1_ref:    [H,  H] bf16    resident weight (the `h` half of the concat linear)
    # o_ref:     [tm, H]         output tile (edge stores clipped by Pallas)
    tm = batch_ref.shape[0]
    bp = gproj_ref.shape[0]

    # Cast the streamed tile to bf16 in-kernel; the VPU cast hides under DMA.
    h_bf16 = h_ref[...].astype(jnp.bfloat16)
    acc = jnp.dot(h_bf16, w1_ref[...], preferred_element_type=jnp.float32)

    # In-kernel gather of the per-graph row: one-hot [tm, Bp] @ [Bp, H] on the MXU.
    # bf16 one-hot (exact 0/1) x bf16 gproj keeps the native MXU path; f32 acc.
    one_hot = (batch_ref[...] ==
               jax.lax.broadcasted_iota(jnp.int32, (tm, bp), 1)).astype(jnp.bfloat16)
    acc += jnp.dot(one_hot, gproj_ref[...], preferred_element_type=jnp.float32)

    o_ref[...] = acc.astype(o_ref.dtype)


def fused_concat_linear(h, gproj, batch, w1, *, tm=2048, out_dtype=None):
    """out[n] = h[n] @ w1 + gproj[batch[n]]   computed tile-by-tile over atoms.

    No padding / slicing of h or the output: the grid is ragged (pl.cdiv) and
    Pallas clips the edge block. Only the tiny per-graph table is padded.
    """
    N, H = h.shape
    B = gproj.shape[0]
    out_dtype = h.dtype if out_dtype is None else out_dtype

    # Tile over atoms: multiple of 8 sublanes, no larger than the problem needs.
    tm = max(8, min(_round_up(tm, 8), _round_up(N, 8)))

    # Pad the tiny per-graph table to a sublane-friendly row count (cheap, B~few).
    bp = max(8, _round_up(B, 8))
    if bp != B:
        gproj = jnp.pad(gproj, ((0, bp - B), (0, 0)))
    gproj_bf16 = gproj.astype(jnp.bfloat16)   # tiny one-time cast, resident in VMEM
    w1_bf16 = w1.astype(jnp.bfloat16)         # tiny one-time cast, resident in VMEM

    # Per-atom graph index as a [N, 1] column (sublane-major, broadcasts over lanes).
    batch2d = batch.astype(jnp.int32).reshape(N, 1)

    # VMEM budget (double-buffered streams + residents). The (tm,1) int32 batch
    # tile is lane-padded to 128 lanes in VMEM -> 512 B/row/buffer; counted here.
    per_step = (tm * H * jnp.dtype(h.dtype).itemsize        # h tile
                + tm * 128 * 4                              # lane-padded batch tile
                + tm * H * jnp.dtype(out_dtype).itemsize)   # output tile
    residents = H * H * 2 + bp * H * 2
    vmem_limit = int(min(max(2 * per_step * 2 + residents, 32 * 1024 * 1024),
                         64 * 1024 * 1024))

    grid = (pl.cdiv(N, tm),)
    out = pl.pallas_call(
        fused_kernel,
        out_shape=jax.ShapeDtypeStruct((N, H), out_dtype),
        grid_spec=pltpu.PrefetchScalarGridSpec(
            num_scalar_prefetch=0,
            grid=grid,
            in_specs=[
                pl.BlockSpec((tm, 1), lambda i: (i, 0)),      # batch indices (streamed)
                pl.BlockSpec((tm, H), lambda i: (i, 0)),      # h tile (streamed)
                pl.BlockSpec((bp, H), lambda i: (0, 0)),      # gproj (VMEM-resident)
                pl.BlockSpec((H, H), lambda i: (0, 0)),       # W1 (VMEM-resident)
            ],
            out_specs=pl.BlockSpec((tm, H), lambda i: (i, 0)),
        ),
        compiler_params=pltpu.CompilerParams(
            # single atom axis: megacore-shardable on v7x, harmless on v5e/v6e
            dimension_semantics=("parallel",),
            vmem_limit_bytes=vmem_limit,
        ),
    )(batch2d, h, gproj_bf16, w1_bf16)

    return out


# ---------------------------------------------------------------------------
# Module wrapper
# ---------------------------------------------------------------------------
class ConcatenationPallas:
    def __init__(self, h_dim, ret_feat_dim, n_heads, key):
        self.h_dim = h_dim
        self.ret_feat_dim = ret_feat_dim
        self.n_heads = n_heads  # unused in forward (matches the PyTorch module)
        k1, k2, k3, k4 = jax.random.split(key, 4)
        # nn.Linear(ret_feat_dim, h_dim): PyTorch stores weight [out, in]; here the
        # weights are stored transposed as [in, out] for right-multiplication.
        # Anyone loading a real checkpoint must transpose Wp / Wl accordingly.
        self.wp = (jax.random.normal(k1, (ret_feat_dim, h_dim), jnp.float32)
                   / np.sqrt(ret_feat_dim))
        self.bp = jax.random.normal(k2, (h_dim,), jnp.float32) * 0.01
        # nn.Linear(2*h_dim, h_dim): weight [h_dim, 2*h_dim] -> transposed [2*h_dim, h_dim]
        wl = (jax.random.normal(k3, (2 * h_dim, h_dim), jnp.float32)
              / np.sqrt(2 * h_dim))
        self.w1 = wl[:h_dim]        # multiplies h
        self.w2 = wl[h_dim:]        # multiplies the gathered retrieval feature
        self.bl = jax.random.normal(k4, (h_dim,), jnp.float32) * 0.01

    def __call__(self, h, ret_feat, batch):
        # Tiny per-graph precompute (B rows): mean over retrieval tokens, ret_proj,
        # then fold the second half of the concat-linear (W2) and its bias in.
        ret_h = jnp.mean(ret_feat, axis=1) @ self.wp + self.bp    # [B, h_dim]
        gproj = ret_h @ self.w2 + self.bl                         # [B, h_dim]
        # Hot path: one Pallas kernel over all atoms. Set out_dtype=jnp.bfloat16
        # here if the consumer of h tolerates bf16 (halves HBM writeback).
        return fused_concat_linear(h, gproj, batch, self.w1)

    def reference(self, h, ret_feat, batch):
        ret_mean = jnp.mean(ret_feat, axis=1)
        ret_h = ret_mean @ self.wp + self.bp
        g = ret_h[batch]
        return jnp.concatenate([h, g], axis=-1) @ jnp.concatenate(
            [self.w1, self.w2], axis=0) + self.bl


if __name__ == "__main__":
    key = jax.random.PRNGKey(0)
    k_mod, k_h, k_r = jax.random.split(key, 3)

    h_dim = 128        # lane-dense feature axis
    ret_feat_dim = 64
    n_heads = 4
    B = 2              # number of graphs in the batch
    K = 8              # retrieval tokens per graph
    N = 16             # total atoms

    module = ConcatenationPallas(h_dim, ret_feat_dim, n_heads, k_mod)

    h = jax.random.normal(k_h, (N, h_dim), jnp.float32)
    ret_feat = jax.random.normal(k_r, (B, K, ret_feat_dim), jnp.float32)
    # atom -> graph assignment (7 atoms in graph 0, 9 in graph 1)
    batch = jnp.concatenate([jnp.zeros((7,), jnp.int32),
                             jnp.ones((9,), jnp.int32)])

    out = module(h, ret_feat, batch)
    out = jax.block_until_ready(out)

    ref = module.reference(h, ret_feat, batch)
    # bf16 matmul operands with f32 accumulation -> loosened tolerance vs f32 ref.
    np.testing.assert_allclose(np.asarray(out), np.asarray(ref),
                               rtol=2e-2, atol=2e-2)
    print("KERNEL_OK")
</pallas_src>

<mosaic_0001>
module attributes {stable_mosaic.version = 11 : i64} {
  func.func @fused_kernel(%arg0: i32, %arg1: memref<16x1xi32, #tpu.memory_space<vmem>>, %arg2: memref<16x128xf32, #tpu.memory_space<vmem>>, %arg3: memref<8x128xbf16, #tpu.memory_space<vmem>>, %arg4: memref<128x128xbf16, #tpu.memory_space<vmem>>, %arg5: memref<16x128xf32, #tpu.memory_space<vmem>>) attributes {dimension_semantics = [#tpu.dimension_semantics<parallel>], iteration_bounds = array<i64: 1>, scalar_prefetch = 0 : i64, scratch_operands = 0 : i64, tpu.core_type = #tpu.core_type<tc>, window_params = [{transform_indices = @transform_0, window_bounds = array<i64: 16, 1>}, {transform_indices = @transform_1, window_bounds = array<i64: 16, 128>}, {pipeline_mode = #tpu.pipeline_mode<synchronous>, transform_indices = @transform_2, window_bounds = array<i64: 8, 128>}, {pipeline_mode = #tpu.pipeline_mode<synchronous>, transform_indices = @transform_3, window_bounds = array<i64: 128, 128>}, {transform_indices = @transform_4, window_bounds = array<i64: 16, 128>}]} {
    %c0 = arith.constant 0 : index
    %c0_0 = arith.constant 0 : index
    %0 = vector.load %arg2[%c0, %c0_0] : memref<16x128xf32, #tpu.memory_space<vmem>>, vector<16x128xf32>
    %1 = arith.truncf %0 : vector<16x128xf32> to vector<16x128xbf16>
    %c0_1 = arith.constant 0 : index
    %c0_2 = arith.constant 0 : index
    %2 = vector.load %arg4[%c0_1, %c0_2] : memref<128x128xbf16, #tpu.memory_space<vmem>>, vector<128x128xbf16>
    %cst = arith.constant dense<0.000000e+00> : vector<16x128xf32>
    %3 = tpu.matmul %1, %2, %cst {dimension_numbers = #tpu.dot_dimension_numbers<[1], [0], [0], [1], [0, 0, 1, 1], [], []>} : vector<16x128xbf16>, vector<128x128xbf16>, vector<16x128xf32> -> vector<16x128xf32>
    %c0_3 = arith.constant 0 : index
    %c0_4 = arith.constant 0 : index
    %4 = vector.load %arg1[%c0_3, %c0_4] : memref<16x1xi32, #tpu.memory_space<vmem>>, vector<16x1xi32>
    %5 = tpu.iota {dimensions = array<i32: 1>} : vector<16x8xi32>
    %6 = vector.broadcast %4 : vector<16x1xi32> to vector<16x8xi32>
    %7 = arith.cmpi eq, %6, %5 : vector<16x8xi32>
    %8 = arith.extui %7 : vector<16x8xi1> to vector<16x8xi32>
    %9 = arith.sitofp %8 : vector<16x8xi32> to vector<16x8xf32>
    %10 = arith.truncf %9 : vector<16x8xf32> to vector<16x8xbf16>
    %c0_5 = arith.constant 0 : index
    %c0_6 = arith.constant 0 : index
    %11 = vector.load %arg3[%c0_5, %c0_6] : memref<8x128xbf16, #tpu.memory_space<vmem>>, vector<8x128xbf16>
    %cst_7 = arith.constant dense<0.000000e+00> : vector<16x128xf32>
    %12 = tpu.matmul %10, %11, %cst_7 {dimension_numbers = #tpu.dot_dimension_numbers<[1], [0], [0], [1], [0, 0, 1, 1], [], []>} : vector<16x8xbf16>, vector<8x128xbf16>, vector<16x128xf32> -> vector<16x128xf32>
    %13 = arith.addf %3, %12 : vector<16x128xf32>
    %c0_8 = arith.constant 0 : index
    %c0_9 = arith.constant 0 : index
    %14 = vector.load %arg5[%c0_8, %c0_9] : memref<16x128xf32, #tpu.memory_space<vmem>>, vector<16x128xf32>
    tpu.vector_store %arg5[%c0_8, %c0_9], %13 {strides = array<i32>} : memref<16x128xf32, #tpu.memory_space<vmem>>, vector<16x128xf32>,
    return
  }
  func.func @transform_0(%arg0: i32) -> (i32, i32) {
    %c0_i32 = arith.constant 0 : i32
    %c0_i32_0 = arith.constant 0 : i32
    return %arg0, %c0_i32 : i32, i32
  }
  func.func @transform_1(%arg0: i32) -> (i32, i32) {
    %c0_i32 = arith.constant 0 : i32
    %c0_i32_0 = arith.constant 0 : i32
    return %arg0, %c0_i32 : i32, i32
  }
  func.func @transform_2(%arg0: i32) -> (i32, i32) {
    %c0_i32 = arith.constant 0 : i32
    %c0_i32_0 = arith.constant 0 : i32
    %c0_i32_1 = arith.constant 0 : i32
    return %c0_i32, %c0_i32_0 : i32, i32
  }
  func.func @transform_3(%arg0: i32) -> (i32, i32) {
    %c0_i32 = arith.constant 0 : i32
    %c0_i32_0 = arith.constant 0 : i32
    %c0_i32_1 = arith.constant 0 : i32
    return %c0_i32, %c0_i32_0 : i32, i32
  }
  func.func @transform_4(%arg0: i32) -> (i32, i32) {
    %c0_i32 = arith.constant 0 : i32
    %c0_i32_0 = arith.constant 0 : i32
    return %arg0, %c0_i32 : i32, i32
  }
}

</mosaic_0001>

<llo_original>
// kernel: tpu_custom_call.1
$region0: #{tpu_custom_call.1}
  #allocation0 [shape = 'u32[]', space=smem, size = 0x4, offset = 0x4, fixed_abs, tag = 'smem constant byte address 0x4 - core index']
  #allocation1 [shape = 'u32[144,128]{1,0:T(1,128)}', space=vmem, size = 0x12000, scoped, tag = 'internal scratch']
  %s0 = inlined_call_operand.vmem [shape: s32[16,1], index: 0, kind: input, shape index: {}]
  %s1 = inlined_call_operand.vmem [shape: f32[16,128], index: 1, kind: input, shape index: {}]
  %s2 = inlined_call_operand.vmem [shape: bf16[8,128], index: 2, kind: input, shape index: {}]
  %s3 = inlined_call_operand.hbm [shape: bf16[128,128], index: 3, kind: input, shape index: {}]
  %s4 = inlined_call_operand.hbm [shape: f32[16,128], index: 4, kind: output, shape index: {}]
  %s5 = sld [smem:[#allocation0]]
  $region30: #{tpu_custom_call.1} parent=0
    _
  %s7 = ssub.s32 1, %s5
  %s8 = scalar_select 0, %s7, %s5
  $region1: #{tpu_custom_call.1} parent=0
    #allocation2 [shape = 'u8[32768]{0}', space=vmem, size = 0x8000, scoped, tag = 'input window, operand 3, single buffered']
    #allocation3 [shape = 's32[1]{0}', space=sflag, size = 0x4, scoped, tag = 'scoped memory for tpu_custom_call.1']
    #allocation4 [shape = 's32[1]{0}', space=sflag, size = 0x4, scoped, tag = 'scoped memory for tpu_custom_call.1']
    #allocation5 [shape = 'u8[8192]{0}', space=vmem, size = 0x2000, scoped, tag = 'output window, operand 0, single buffered']
    %9 = vsyncpa [#allocation3], 0
    %10 = vsyncpa [#allocation4], 0
    // Predicated region
    $region2: #{tpu_custom_call.1} parent=1 // pred_check
      _
    $region3: #{tpu_custom_call.1} parent=1 // pred_check_branch
      %12 = sbr.rel (0) target = $region5
    $region4: #{tpu_custom_call.1} parent=1 // pred_region
      _
    $region5: #{tpu_custom_call.1} parent=1 // pred_fallthru
      _
    // Predicated region
    $region6: #{tpu_custom_call.1} parent=1 // pred_check
      _
    $region7: #{tpu_custom_call.1} parent=1 // pred_check_branch
      %14 = sbr.rel (0) target = $region9
    $region8: #{tpu_custom_call.1} parent=1 // pred_region
      _
    $region9: #{tpu_custom_call.1} parent=1 // pred_fallthru
      _
    // Predicated region
    $region10: #{tpu_custom_call.1} parent=1 // pred_check
      _
    $region11: #{tpu_custom_call.1} parent=1 // pred_check_branch
      %16 = sbr.rel (0) target = $region13
    $region12: #{tpu_custom_call.1} parent=1 // pred_region
      _
    $region13: #{tpu_custom_call.1} parent=1 // pred_fallthru
      _
    // Predicated region
    $region14: #{tpu_custom_call.1} parent=1 // pred_check
      _
    $region15: #{tpu_custom_call.1} parent=1 // pred_check_branch
      %18 = sbr.rel (0) target = $region17
    $region16: #{tpu_custom_call.1} parent=1 // pred_region
      %s20 = ssub.s32 1024, 1024
      %21 = vsyncadd [#allocation3], %s20
      %s22 = sshll.u32 [#allocation2], 4
      %s23 = int_to_ptr.vmem [resolvable:$true] %s22
      %28 = dma.hbm_to_vmem [thread:$0]  %s3, 1024, %s23, [#allocation3], 64, 64, 4
    $region17: #{tpu_custom_call.1} parent=1 // pred_fallthru
      _
    // Predicated region
    $region18: #{tpu_custom_call.1} parent=1 // pred_check
      _
    $region19: #{tpu_custom_call.1} parent=1 // pred_check_branch
      %30 = sbr.rel (0) target = $region21
    $region20: #{tpu_custom_call.1} parent=1 // pred_region
      %31 = dma.done [#allocation3], 1024
    $region21: #{tpu_custom_call.1} parent=1 // pred_fallthru
      _
    %v33 = vld [vmem:[%s1] sm:$0xff]
    %v34 = vld [vmem:[%s1 + $0x8] sm:$0xff]
    %v35 = vpack.c.bf16 %v34, %v33
    %v36 = vld [vmem:[#allocation2] sm:$0xf]
    %v37 = vld [vmem:[#allocation2 + $0x4] sm:$0xf]
    %v38 = vld [vmem:[#allocation2 + $0x8] sm:$0xf]
    %v39 = vld [vmem:[#allocation2 + $0xc] sm:$0xf]
    %v40 = vld [vmem:[#allocation2 + $0x10] sm:$0xf]
    %v41 = vld [vmem:[#allocation2 + $0x14] sm:$0xf]
    %v42 = vld [vmem:[#allocation2 + $0x18] sm:$0xf]
    %v43 = vld [vmem:[#allocation2 + $0x1c] sm:$0xf]
    %v44 = vld [vmem:[#allocation2 + $0x20] sm:$0xf]
    %v45 = vld [vmem:[#allocation2 + $0x24] sm:$0xf]
    %v46 = vld [vmem:[#allocation2 + $0x28] sm:$0xf]
    %v47 = vld [vmem:[#allocation2 + $0x2c] sm:$0xf]
    %v48 = vld [vmem:[#allocation2 + $0x30] sm:$0xf]
    %v49 = vld [vmem:[#allocation2 + $0x34] sm:$0xf]
    %v50 = vld [vmem:[#allocation2 + $0x38] sm:$0xf]
    %v51 = vld [vmem:[#allocation2 + $0x3c] sm:$0xf]
    %v52 = vld [vmem:[%s0] sm:$0xff]
    %v53 = vld [vmem:[%s0 + $0x8] sm:$0xff]
    %v54 = vlaneseq
    %v55 = vand.u32 %v54, 127
    %56 = vset.pattern.permute.xlu0 0
    %57 = vperm.xlu0 %56, %v52
    %v58 = vpop.permute.xlu0 %57
    %59 = vset.pattern.permute.xlu0 0
    %60 = vperm.xlu0 %59, %v53
    %v61 = vpop.permute.xlu0 %60
    %vm62 = vcmp.eq.s32.totalorder %v58, %v55
    %vm63 = vcmp.eq.s32.totalorder %v61, %v55
    %v64 = vsel %vm62, 1, 0
    %v65 = vsel %vm63, 1, 0
    %v66 = vcvt.s32.f32 %v64
    %v67 = vcvt.s32.f32 %v65
    %v68 = vpack.c.bf16 %v67, %v66
    %v69 = vld [vmem:[%s2] sm:$0xf]
    %vm70 = vcmask 64512
    %v72 = vsel %vm70, %v68, 0
    %vm74 = vcmask 1043456
    %v76 = vsel %vm74, %v69, 0
    %78 = vmatprep.subr.bf16.mxu0 0
    %79 = vmatpush1.bf16.msra.mxu0 %v76
    %80 = vmatprep.subr.bf16.mxu0 0
    %81 = vmatpush1.bf16.msra.mxu0 0
    %82 = vmatprep.subr.bf16.mxu0 0
    %83 = vmatpush1.bf16.msra.mxu0 0
    %84 = vmatprep.subr.bf16.mxu0 0
    %85 = vmatpush1.bf16.msra.mxu0 0
    %86 = vmatprep.subr.bf16.mxu0 0
    %87 = vmatpush1.bf16.msra.mxu0 0
    %88 = vmatprep.subr.bf16.mxu0 0
    %89 = vmatpush1.bf16.msra.mxu0 0
    %90 = vmatprep.subr.bf16.mxu0 0
    %91 = vmatpush1.bf16.msra.mxu0 0
    %92 = vmatprep.subr.bf16.mxu0 0
    %93 = vmatpush1.bf16.msra.mxu0 0
    %94 = vmatprep.subr.bf16.mxu0 0
    %95 = vmatpush1.bf16.msra.mxu0 0
    %96 = vmatprep.subr.bf16.mxu0 0
    %97 = vmatpush1.bf16.msra.mxu0 0
    %98 = vmatprep.subr.bf16.mxu0 0
    %99 = vmatpush1.bf16.msra.mxu0 0
    %100 = vmatprep.subr.bf16.mxu0 0
    %101 = vmatpush1.bf16.msra.mxu0 0
    %102 = vmatprep.subr.bf16.mxu0 0
    %103 = vmatpush1.bf16.msra.mxu0 0
    %104 = vmatprep.subr.bf16.mxu0 0
    %105 = vmatpush1.bf16.msra.mxu0 0
    %106 = vmatprep.subr.bf16.mxu0 0
    %107 = vmatpush1.bf16.msra.mxu0 0
    %108 = vmatprep.subr.bf16.mxu0 0
    %109 = vmatpush1.bf16.msra.mxu0 0
    %110 = vmatprep.mubr.bf16.mxu0 0
    %111 = vmatmul.mubr.bf16.gmra.mrb[0].mxu0 %v72
    %v112 = vpop.f32.mrb[0].mxu0
    %v113 = vadd.f32 0.0, %v112
    %v114 = vpop.f32.mrb[0].mxu0
    %v115 = vpop.f32.mrb[0].mxu0
    %v116 = vadd.f32 0.0, %v115
    %v117 = vpop.f32.mrb[0].mxu0
    %118 = vdwg.mxu0
    %v135 = vunpack.c.l.b16 %v36
    %v136 = vunpack.c.l.b16 %v37
    %v137 = vunpack.c.l.b16 %v38
    %v138 = vunpack.c.l.b16 %v39
    %v139 = vunpack.c.l.b16 %v40
    %v140 = vunpack.c.l.b16 %v41
    %v141 = vunpack.c.l.b16 %v42
    %v142 = vunpack.c.l.b16 %v43
    %v143 = vunpack.c.l.b16 %v44
    %v144 = vunpack.c.l.b16 %v45
    %v145 = vunpack.c.l.b16 %v46
    %v146 = vunpack.c.l.b16 %v47
    %v147 = vunpack.c.l.b16 %v48
    %v148 = vunpack.c.l.b16 %v49
    %v149 = vunpack.c.l.b16 %v50
    %v150 = vunpack.c.l.b16 %v51
    %v151 = vpack.c.b16 %v136, %v135
    %v152 = vpack.c.b16 %v138, %v137
    %v153 = vpack.c.b16 %v140, %v139
    %v154 = vpack.c.b16 %v142, %v141
    %v155 = vpack.c.b16 %v144, %v143
    %v156 = vpack.c.b16 %v146, %v145
    %v157 = vpack.c.b16 %v148, %v147
    %v158 = vpack.c.b16 %v150, %v149
    %167 = vmatprep.subr.bf16.mxu0 0
    %168 = vmatpush1.bf16.msra.mxu0 %v151
    %169 = vmatprep.subr.bf16.mxu0 0
    %170 = vmatpush1.bf16.msra.mxu0 %v152
    %171 = vmatprep.subr.bf16.mxu0 0
    %172 = vmatpush1.bf16.msra.mxu0 %v153
    %173 = vmatprep.subr.bf16.mxu0 0
    %174 = vmatpush1.bf16.msra.mxu0 %v154
    %175 = vmatprep.subr.bf16.mxu0 0
    %176 = vmatpush1.bf16.msra.mxu0 %v155
    %177 = vmatprep.subr.bf16.mxu0 0
    %178 = vmatpush1.bf16.msra.mxu0 %v156
    %179 = vmatprep.subr.bf16.mxu0 0
    %180 = vmatpush1.bf16.msra.mxu0 %v157
    %181 = vmatprep.subr.bf16.mxu0 0
    %182 = vmatpush1.bf16.msra.mxu0 %v158
    %183 = vmatprep.subr.bf16.mxu0 0
    %184 = vmatpush1.bf16.msra.mxu0 0
    %185 = vmatprep.subr.bf16.mxu0 0
    %186 = vmatpush1.bf16.msra.mxu0 0
    %187 = vmatprep.subr.bf16.mxu0 0
    %188 = vmatpush1.bf16.msra.mxu0 0
    %189 = vmatprep.subr.bf16.mxu0 0
    %190 = vmatpush1.bf16.msra.mxu0 0
    %191 = vmatprep.subr.bf16.mxu0 0
    %192 = vmatpush1.bf16.msra.mxu0 0
    %193 = vmatprep.subr.bf16.mxu0 0
    %194 = vmatpush1.bf16.msra.mxu0 0
    %195 = vmatprep.subr.bf16.mxu0 0
    %196 = vmatpush1.bf16.msra.mxu0 0
    %197 = vmatprep.subr.bf16.mxu0 0
    %198 = vmatpush1.bf16.msra.mxu0 0
    %199 = vmatprep.mubr.bf16.mxu0 0
    %200 = vmatmul.mubr.bf16.gmra.mrb[0].mxu0 %v35
    %v201 = vpop.f32.mrb[0].mxu0
    %v202 = vadd.f32 %v113, %v201
    %v203 = vpop.f32.mrb[0].mxu0
    %v204 = vpop.f32.mrb[0].mxu0
    %v205 = vadd.f32 %v116, %v204
    %v206 = vpop.f32.mrb[0].mxu0
    %207 = vdwg.mxu0
    %208 = vst [vmem:[#allocation5] sm:$0xff] %v202
    %209 = vst [vmem:[#allocation5 + $0x8] sm:$0xff] %v205
    // Predicated region
    $region22: #{tpu_custom_call.1} parent=1 // pred_check
      _
    $region23: #{tpu_custom_call.1} parent=1 // pred_check_branch
      %211 = sbr.rel (0) target = $region25
    $region24: #{tpu_custom_call.1} parent=1 // pred_region
      %s213 = ssub.s32 256, 256
      %214 = vsyncadd [#allocation4], %s213
      %s215 = sshll.u32 [#allocation5], 4
      %s216 = int_to_ptr.vmem [resolvable:$true] %s215
      %221 = dma.vmem_to_hbm [thread:$0]  %s216, 256, %s4, [#allocation4], 128, 128, 8
    $region25: #{tpu_custom_call.1} parent=1 // pred_fallthru
      _
    // Predicated region
    $region26: #{tpu_custom_call.1} parent=1 // pred_check
      _
    $region27: #{tpu_custom_call.1} parent=1 // pred_check_branch
      %223 = sbr.rel (0) target = $region29
    $region28: #{tpu_custom_call.1} parent=1 // pred_region
      %224 = dma.done [#allocation4], 256
    $region29: #{tpu_custom_call.1} parent=1 // pred_fallthru
      _
    %225 = vsyncpa [#allocation3], 1
    %226 = vsyncpa [#allocation4], 1

</llo_original>
